<compile_context>
chip_gen: v7x
topology: tpu7x:2x2x1
jax: 0.10.0
libtpu: 0.0.40
codegen_flags: <defaults>
</compile_context>

<pallas_src>
import functools

import jax
import jax.numpy as jnp
from jax.experimental import pallas as pl
from jax.experimental.pallas import tpu as pltpu


def _fold_lanes(x, tp, fw):
    """Tree-add lane-aligned column slices: (R, tp) -> (R, fw).

    Slices are whole-vreg (128-lane aligned), so this is pure VPU adds -- no
    XLU relayout -- and it cuts the resident-accumulator traffic by tp/fw.
    """
    if tp == fw:
        return x
    parts = [x[:, k * fw:(k + 1) * fw] for k in range(tp // fw)]
    while len(parts) > 1:
        nxt = [parts[i] + parts[i + 1] for i in range(0, len(parts) - 1, 2)]
        if len(parts) % 2:
            nxt.append(parts[-1])
        parts = nxt
    return parts[0]


def _hybrid_stats_kernel(x_ref, t_ref,
                         inter_ref, psum_ref, cnt_ref, foc_ref, vcnt_ref,
                         *, gamma, ignore_index, s_total, tile_pixels,
                         fold_width, s_tiles, work_per_shard, total_work,
                         need_tail_mask, need_overrun_mask):
    w = pl.program_id(1)

    @pl.when(w == 0)
    def _init():
        inter_ref[...] = jnp.zeros_like(inter_ref)
        psum_ref[...] = jnp.zeros_like(psum_ref)
        cnt_ref[...] = jnp.zeros_like(cnt_ref)
        foc_ref[...] = jnp.zeros_like(foc_ref)
        vcnt_ref[...] = jnp.zeros_like(vcnt_ref)

    g = pl.program_id(0)
    flat = g * work_per_shard + w                 # flattened (image, s-tile) id
    flat_c = jnp.minimum(flat, total_work - 1) if need_overrun_mask else flat

    logits = x_ref[...].astype(jnp.float32)       # (C, TP) -- f32 math in-kernel
    tgt = t_ref[...].astype(jnp.int32)            # (1, TP)

    valid = tgt != ignore_index                   # (1, TP)
    if need_tail_mask:
        # Only a partial tail tile can hold garbage (possibly NaN/Inf) columns:
        # mask them out of `valid` and zero the logits so NaN*0 cannot poison
        # the masked accumulation.  (ignore_index pixels have finite logits, so
        # no full-valid sanitize is needed on the common path.)
        s_tile = flat_c % s_tiles if s_tiles > 1 else 0
        pos = (jax.lax.broadcasted_iota(jnp.int32, (1, tile_pixels), 1)
               + s_tile * tile_pixels)
        in_image = pos < s_total
        valid = valid & in_image
        logits = jnp.where(in_image, logits, 0.0)

    valid_f = valid.astype(jnp.float32)           # (1, TP)
    if need_overrun_mask:
        # Shard tail overrun re-reads a real (finite) block; zero its
        # contribution via the float mask (scalar broadcast multiply).
        valid_f = valid_f * (flat < total_work).astype(jnp.float32)
    tgt_c = jnp.where(valid, tgt, 0)

    # Numerically stable softmax over the class (sublane) axis.
    m = jnp.max(logits, axis=0, keepdims=True)    # (1, TP)
    z = logits - m
    ez = jnp.exp(z)
    se = jnp.sum(ez, axis=0, keepdims=True)       # (1, TP)
    inv_se = pl.reciprocal(se, approx=False)      # exact: preserves 1e-6 atol
    p = ez * inv_se                               # (C, TP) softmax probs

    class_ids = jax.lax.broadcasted_iota(jnp.int32, logits.shape, 0)
    oh_m = jnp.where(class_ids == tgt_c, valid_f, 0.0)   # masked one-hot (C, TP)

    # --- Focal loss (class_weights=None branch of FocalLoss) ---
    # No full (C, TP) log-softmax is materialized: logp[target] = z[target] - log(se).
    t_z = jnp.sum(z * oh_m, axis=0, keepdims=True)        # (1, TP) = z[target]
    t_logp = t_z - jnp.log(se)                             # log p[target] on valid lanes
    po = p * oh_m                                          # (C, TP) masked target prob
    t_p = jnp.sum(po, axis=0, keepdims=True)               # (1, TP) = p[target]
    one_m = jnp.maximum(1.0 - t_p, 0.0)
    if gamma == 1.0:                   # trace-time special cases avoid jnp.power
        ff = one_m
    elif gamma == 2.0:
        ff = one_m * one_m
    else:
        ff = jnp.power(one_m, gamma)
    focal = ff * (-t_logp) * valid_f                       # (1, TP)

    p_m = p * valid_f                                      # (C, TP) masked probs

    # Fold to `fold_width` lanes first, then accumulate into the small resident
    # output blocks.  The single cross-lane reduction happens in the JAX epilogue.
    inter_ref[...] += _fold_lanes(po, tile_pixels, fold_width)
    psum_ref[...] += _fold_lanes(p_m, tile_pixels, fold_width)
    cnt_ref[...] += _fold_lanes(oh_m, tile_pixels, fold_width)
    foc_ref[...] += _fold_lanes(focal, tile_pixels, fold_width)
    vcnt_ref[...] += _fold_lanes(valid_f, tile_pixels, fold_width)


def _default_num_shards():
    # v7x has 2 TensorCores per chip (the "parallel" shard axis is split across
    # them); v5e / v6e have a single TC, where an extra shard is pure serial
    # overhead (double init / writeback / epilogue).
    try:
        kind = jax.devices()[0].device_kind.lower()
    except Exception:
        return 1
    return 2 if "v7" in kind else 1


def hybrid_loss(logits_nchw, target_nhw, class_weights=None, *,
                alpha=0.5, ignore_index=255, gamma=1.0, smooth=1.0,
                tile_pixels=8192, num_shards=None, vmem_limit_bytes=None):
    """Pallas implementation of HybridLoss.forward.

    logits_nchw : (N, C, H, W) float (any float dtype; DMA'd in native dtype)
    target_nhw  : (N, H, W) int (may contain ignore_index)
    """
    N, C, H, W = logits_nchw.shape
    S = H * W
    x = logits_nchw.reshape(N, C, S)              # pure reshape, no extra HBM pass
    t = target_nhw.reshape(N, 1, S)
    if t.dtype != jnp.int32:
        t = t.astype(jnp.int32)

    assert tile_pixels % 128 == 0, "tile_pixels must be a multiple of 128"
    # Cap the tile so the double-buffered f32 logits block stays well under the
    # scoped-VMEM default (32 MiB; v7x physical ceiling is 64 MiB per TC).
    max_tp_from_vmem = (8 * 1024 * 1024) // (2 * max(C, 1) * 4)
    eff_tile = max(128, min(tile_pixels, (max_tp_from_vmem // 128) * 128))
    if S <= eff_tile:
        tp, s_tiles = S, 1                        # single full-extent tile
    else:
        tp = eff_tile
        s_tiles = pl.cdiv(S, tp)                  # tail tile masked in-kernel

    fold_width = 128 if tp % 128 == 0 else tp     # lane-fold target width

    if num_shards is None:
        num_shards = _default_num_shards()
    total_work = N * s_tiles
    num_shards = max(1, min(int(num_shards), total_work))
    work_per_shard = pl.cdiv(total_work, num_shards)

    need_tail_mask = (S % tp) != 0
    need_overrun_mask = (num_shards * work_per_shard) != total_work

    def in_map(g, w):
        flat = jnp.minimum(g * work_per_shard + w, total_work - 1)
        if s_tiles == 1:
            return (flat, 0, 0)
        return (flat // s_tiles, 0, flat % s_tiles)

    def out_map(g, w):
        return (g, 0, 0)

    kernel = functools.partial(
        _hybrid_stats_kernel,
        gamma=float(gamma), ignore_index=int(ignore_index),
        s_total=S, tile_pixels=tp, fold_width=fold_width, s_tiles=s_tiles,
        work_per_shard=work_per_shard, total_work=total_work,
        need_tail_mask=need_tail_mask, need_overrun_mask=need_overrun_mask)

    cls_stat = jax.ShapeDtypeStruct((num_shards, C, fold_width), jnp.float32)
    px_stat = jax.ShapeDtypeStruct((num_shards, 1, fold_width), jnp.float32)

    cp_kwargs = dict(dimension_semantics=("parallel", "arbitrary"))
    if vmem_limit_bytes is not None:              # e.g. explicit cap on v7x
        cp_kwargs["vmem_limit_bytes"] = int(vmem_limit_bytes)

    # Note: on v5e with f32 logits and exposed DMA, pipeline_mode=pl.Buffered(3)
    # on the logits BlockSpec can hide the extra latency; unnecessary on v6e/v7x.
    inter_p, psum_p, cnt_p, foc_p, vcnt_p = pl.pallas_call(
        kernel,
        out_shape=(cls_stat, cls_stat, cls_stat, px_stat, px_stat),
        grid_spec=pltpu.PrefetchScalarGridSpec(
            num_scalar_prefetch=0,
            grid=(num_shards, work_per_shard),
            in_specs=[
                pl.BlockSpec((None, C, tp), in_map),   # logits: classes on sublanes
                pl.BlockSpec((None, 1, tp), in_map),   # targets
            ],
            out_specs=(
                pl.BlockSpec((None, C, fold_width), out_map),  # intersection partials
                pl.BlockSpec((None, C, fold_width), out_map),  # prob-sum partials
                pl.BlockSpec((None, C, fold_width), out_map),  # target-count partials
                pl.BlockSpec((None, 1, fold_width), out_map),  # focal partial sums
                pl.BlockSpec((None, 1, fold_width), out_map),  # valid-pixel counts
            ),
        ),
        compiler_params=pltpu.CompilerParams(**cp_kwargs),
    )(x, t)

    # O(C) finalize in plain JAX (combines per-shard / per-lane partials).
    inter = jnp.sum(inter_p, axis=(0, 2))
    psum = jnp.sum(psum_p, axis=(0, 2))
    cnt = jnp.sum(cnt_p, axis=(0, 2))
    foc = jnp.sum(foc_p)
    vcnt = jnp.sum(vcnt_p)   # 0 valid pixels -> NaN, matching the reference

    union = psum + cnt
    dice = (2.0 * inter + smooth) / (union + smooth)
    dice_loss_per_class = 1.0 - dice
    if class_weights is None:
        cw = jnp.ones((C,), jnp.float32)
    else:
        cw = jnp.asarray(class_weights, jnp.float32).reshape(C)
    # sum_p dlpc[target_p] * w[target_p] == sum_c cnt[c] * dlpc[c] * w[c]
    dice_loss = jnp.sum(cnt * dice_loss_per_class * cw) / vcnt
    focal_loss = foc / vcnt
    return alpha * focal_loss + (1.0 - alpha) * dice_loss


def _reference_hybrid_loss(logits_nchw, target_nhw, class_weights, *,
                           alpha, ignore_index, gamma, smooth):
    N, C, H, W = logits_nchw.shape
    x = jnp.transpose(logits_nchw, (0, 2, 3, 1)).reshape(-1, C).astype(jnp.float32)
    t = target_nhw.reshape(-1).astype(jnp.int32)
    mask = (t != ignore_index)
    maskf = mask.astype(jnp.float32)
    tc = jnp.where(mask, t, 0)
    logp = jax.nn.log_softmax(x, axis=1)
    p = jnp.exp(logp)
    oh = jax.nn.one_hot(tc, C, dtype=jnp.float32) * maskf[:, None]
    vcnt = jnp.sum(maskf)
    # focal
    t_logp = jnp.sum(logp * oh, axis=1)
    t_p = jnp.sum(p * oh, axis=1)
    focal = jnp.power(jnp.maximum(1.0 - t_p, 0.0), gamma) * (-t_logp) * maskf
    focal_loss = jnp.sum(focal) / vcnt
    # dice
    pm = p * maskf[:, None]
    inter = jnp.sum(pm * oh, axis=0)
    union = jnp.sum(pm, axis=0) + jnp.sum(oh, axis=0)
    dice = (2.0 * inter + smooth) / (union + smooth)
    dlpc = 1.0 - dice
    cw = jnp.ones((C,), jnp.float32) if class_weights is None \
        else jnp.asarray(class_weights, jnp.float32).reshape(-1)
    dice_loss = jnp.sum(jnp.sum(oh, axis=0) * dlpc * cw) / vcnt
    return alpha * focal_loss + (1 - alpha) * dice_loss


if __name__ == "__main__":
    key = jax.random.PRNGKey(0)
    ignore_index = 255

    # --- Test 1: single full tile (lane fold 256->128), gamma=1.0, dice weights ---
    N, C, H, W = 2, 4, 16, 16
    k1, k2, k3 = jax.random.split(key, 3)
    logits = jax.random.normal(k1, (N, C, H, W), jnp.float32)
    target = jax.random.randint(k2, (N, H, W), 0, C, jnp.int32)
    target = jnp.where(jax.random.uniform(k3, (N, H, W)) < 0.1, ignore_index, target)
    class_weights = jnp.array([1.0, 2.0, 0.5, 1.5], jnp.float32)

    loss = hybrid_loss(logits, target, class_weights,
                       alpha=0.5, ignore_index=ignore_index,
                       gamma=1.0, smooth=1.0)
    loss = jax.block_until_ready(loss)
    ref = _reference_hybrid_loss(logits, target, class_weights,
                                 alpha=0.5, ignore_index=ignore_index,
                                 gamma=1.0, smooth=1.0)
    assert jnp.allclose(loss, ref, rtol=1e-5, atol=1e-6), (loss, ref)

    # --- Test 2: multi-tile with partial tail + forced shard overrun, gamma=2.0 ---
    N2, C2, H2, W2 = 2, 4, 20, 20
    k4, k5, k6 = jax.random.split(k3, 3)
    logits2 = jax.random.normal(k4, (N2, C2, H2, W2), jnp.float32)
    target2 = jax.random.randint(k5, (N2, H2, W2), 0, C2, jnp.int32)
    target2 = jnp.where(jax.random.uniform(k6, (N2, H2, W2)) < 0.15, ignore_index, target2)

    loss2 = hybrid_loss(logits2, target2, None,
                        alpha=0.25, ignore_index=ignore_index,
                        gamma=2.0, smooth=1.0, tile_pixels=128, num_shards=3)
    loss2 = jax.block_until_ready(loss2)
    ref2 = _reference_hybrid_loss(logits2, target2, None,
                                  alpha=0.25, ignore_index=ignore_index,
                                  gamma=2.0, smooth=1.0)
    assert jnp.allclose(loss2, ref2, rtol=1e-5, atol=1e-6), (loss2, ref2)

    # --- Test 3: default (large) tile -> full-extent S=400 (not a multiple of 128) ---
    loss3 = hybrid_loss(logits2, target2, None,
                        alpha=0.25, ignore_index=ignore_index,
                        gamma=2.0, smooth=1.0)
    loss3 = jax.block_until_ready(loss3)
    assert jnp.allclose(loss3, ref2, rtol=1e-5, atol=1e-6), (loss3, ref2)

    print("KERNEL_OK")
</pallas_src>

<mosaic_0001>
module attributes {stable_mosaic.version = 11 : i64} {
  func.func @_hybrid_stats_kernel(%arg0: i32, %arg1: i32, %arg2: memref<1x4x256xf32, #tpu.memory_space<vmem>>, %arg3: memref<1x1x256xi32, #tpu.memory_space<vmem>>, %arg4: memref<1x4x128xf32, #tpu.memory_space<vmem>>, %arg5: memref<1x4x128xf32, #tpu.memory_space<vmem>>, %arg6: memref<1x4x128xf32, #tpu.memory_space<vmem>>, %arg7: memref<1x1x128xf32, #tpu.memory_space<vmem>>, %arg8: memref<1x1x128xf32, #tpu.memory_space<vmem>>) attributes {dimension_semantics = [#tpu.dimension_semantics<parallel>, #tpu.dimension_semantics<arbitrary>], iteration_bounds = array<i64: 1, 2>, scalar_prefetch = 0 : i64, scratch_operands = 0 : i64, tpu.core_type = #tpu.core_type<tc>, window_params = [{transform_indices = @transform_0, window_bounds = array<i64: 1, 4, 256>}, {transform_indices = @transform_1, window_bounds = array<i64: 1, 1, 256>}, {transform_indices = @transform_2, window_bounds = array<i64: 1, 4, 128>}, {transform_indices = @transform_3, window_bounds = array<i64: 1, 4, 128>}, {transform_indices = @transform_4, window_bounds = array<i64: 1, 4, 128>}, {transform_indices = @transform_5, window_bounds = array<i64: 1, 1, 128>}, {transform_indices = @transform_6, window_bounds = array<i64: 1, 1, 128>}]} {
    %c0_i32 = arith.constant 0 : i32
    %0 = arith.cmpi eq, %arg1, %c0_i32 : i32
    %1 = arith.extui %0 : i1 to i32
    %c0_i32_0 = arith.constant 0 : i32
    %2 = arith.cmpi ne, %1, %c0_i32_0 : i32
    scf.if %2 {
      %cst_44 = arith.constant 0.000000e+00 : f32
      %93 = vector.broadcast %cst_44 : f32 to vector<4x128xf32>
      %c0_45 = arith.constant 0 : index
      %c0_46 = arith.constant 0 : index
      %c0_47 = arith.constant 0 : index
      %94 = vector.load %arg4[%c0_45, %c0_46, %c0_47] : memref<1x4x128xf32, #tpu.memory_space<vmem>>, vector<1x4x128xf32>
      %95 = vector.shape_cast %94 : vector<1x4x128xf32> to vector<4x128xf32>
      %96 = vector.shape_cast %93 : vector<4x128xf32> to vector<1x4x128xf32>
      tpu.vector_store %arg4[%c0_45, %c0_46, %c0_47], %96 {strides = array<i32>} : memref<1x4x128xf32, #tpu.memory_space<vmem>>, vector<1x4x128xf32>,
      %cst_48 = arith.constant 0.000000e+00 : f32
      %97 = vector.broadcast %cst_48 : f32 to vector<4x128xf32>
      %c0_49 = arith.constant 0 : index
      %c0_50 = arith.constant 0 : index
      %c0_51 = arith.constant 0 : index
      %98 = vector.load %arg5[%c0_49, %c0_50, %c0_51] : memref<1x4x128xf32, #tpu.memory_space<vmem>>, vector<1x4x128xf32>
      %99 = vector.shape_cast %98 : vector<1x4x128xf32> to vector<4x128xf32>
      %100 = vector.shape_cast %97 : vector<4x128xf32> to vector<1x4x128xf32>
      tpu.vector_store %arg5[%c0_49, %c0_50, %c0_51], %100 {strides = array<i32>} : memref<1x4x128xf32, #tpu.memory_space<vmem>>, vector<1x4x128xf32>,
      %cst_52 = arith.constant 0.000000e+00 : f32
      %101 = vector.broadcast %cst_52 : f32 to vector<4x128xf32>
      %c0_53 = arith.constant 0 : index
      %c0_54 = arith.constant 0 : index
      %c0_55 = arith.constant 0 : index
      %102 = vector.load %arg6[%c0_53, %c0_54, %c0_55] : memref<1x4x128xf32, #tpu.memory_space<vmem>>, vector<1x4x128xf32>
      %103 = vector.shape_cast %102 : vector<1x4x128xf32> to vector<4x128xf32>
      %104 = vector.shape_cast %101 : vector<4x128xf32> to vector<1x4x128xf32>
      tpu.vector_store %arg6[%c0_53, %c0_54, %c0_55], %104 {strides = array<i32>} : memref<1x4x128xf32, #tpu.memory_space<vmem>>, vector<1x4x128xf32>,
      %cst_56 = arith.constant 0.000000e+00 : f32
      %105 = vector.broadcast %cst_56 : f32 to vector<1x128xf32>
      %c0_57 = arith.constant 0 : index
      %c0_58 = arith.constant 0 : index
      %c0_59 = arith.constant 0 : index
      %106 = vector.load %arg7[%c0_57, %c0_58, %c0_59] : memref<1x1x128xf32, #tpu.memory_space<vmem>>, vector<1x1x128xf32>
      %107 = vector.shape_cast %106 : vector<1x1x128xf32> to vector<1x128xf32>
      %108 = vector.shape_cast %105 : vector<1x128xf32> to vector<1x1x128xf32>
      tpu.vector_store %arg7[%c0_57, %c0_58, %c0_59], %108 {strides = array<i32>} : memref<1x1x128xf32, #tpu.memory_space<vmem>>, vector<1x1x128xf32>,
      %cst_60 = arith.constant 0.000000e+00 : f32
      %109 = vector.broadcast %cst_60 : f32 to vector<1x128xf32>
      %c0_61 = arith.constant 0 : index
      %c0_62 = arith.constant 0 : index
      %c0_63 = arith.constant 0 : index
      %110 = vector.load %arg8[%c0_61, %c0_62, %c0_63] : memref<1x1x128xf32, #tpu.memory_space<vmem>>, vector<1x1x128xf32>
      %111 = vector.shape_cast %110 : vector<1x1x128xf32> to vector<1x128xf32>
      %112 = vector.shape_cast %109 : vector<1x128xf32> to vector<1x1x128xf32>
      tpu.vector_store %arg8[%c0_61, %c0_62, %c0_63], %112 {strides = array<i32>} : memref<1x1x128xf32, #tpu.memory_space<vmem>>, vector<1x1x128xf32>,
    } else {
    }
    %c0 = arith.constant 0 : index
    %c0_1 = arith.constant 0 : index
    %c0_2 = arith.constant 0 : index
    %3 = vector.load %arg2[%c0, %c0_1, %c0_2] : memref<1x4x256xf32, #tpu.memory_space<vmem>>, vector<1x4x256xf32>
    %4 = vector.shape_cast %3 : vector<1x4x256xf32> to vector<4x256xf32>
    %c0_3 = arith.constant 0 : index
    %c0_4 = arith.constant 0 : index
    %c0_5 = arith.constant 0 : index
    %5 = vector.load %arg3[%c0_3, %c0_4, %c0_5] : memref<1x1x256xi32, #tpu.memory_space<vmem>>, vector<1x1x256xi32>
    %6 = vector.shape_cast %5 : vector<1x1x256xi32> to vector<1x256xi32>
    %c255_i32 = arith.constant 255 : i32
    %7 = vector.broadcast %c255_i32 : i32 to vector<1x256xi32>
    %8 = arith.cmpi ne, %6, %7 : vector<1x256xi32>
    %9 = arith.extui %8 : vector<1x256xi1> to vector<1x256xi32>
    %10 = arith.sitofp %9 : vector<1x256xi32> to vector<1x256xf32>
    %c0_i32_6 = arith.constant 0 : i32
    %11 = vector.broadcast %c0_i32_6 : i32 to vector<1x256xi32>
    %12 = arith.select %8, %6, %11 : vector<1x256xi1>, vector<1x256xi32>
    %cst = arith.constant dense<0xFF800000> : vector<256xf32>
    %13 = vector.multi_reduction <maximumf>, %4, %cst [0] : vector<4x256xf32> to vector<256xf32>
    %14 = vector.shape_cast %13 : vector<256xf32> to vector<1x256xf32>
    %15 = vector.broadcast %14 : vector<1x256xf32> to vector<4x256xf32>
    %16 = arith.subf %4, %15 : vector<4x256xf32>
    %17 = math.exp %16 : vector<4x256xf32>
    %cst_7 = arith.constant dense<0.000000e+00> : vector<256xf32>
    %18 = vector.multi_reduction <add>, %17, %cst_7 [0] : vector<4x256xf32> to vector<256xf32>
    %19 = vector.shape_cast %18 : vector<256xf32> to vector<1x256xf32>
    %20 = tpu.reciprocal %19 : vector<1x256xf32> -> vector<1x256xf32>
    %21 = vector.broadcast %20 : vector<1x256xf32> to vector<4x256xf32>
    %22 = arith.mulf %17, %21 : vector<4x256xf32>
    %23 = tpu.iota {dimensions = array<i32: 0>} : vector<4x256xi32>
    %24 = vector.broadcast %12 : vector<1x256xi32> to vector<4x256xi32>
    %25 = arith.cmpi eq, %23, %24 : vector<4x256xi32>
    %cst_8 = arith.constant 0.000000e+00 : f32
    %26 = vector.shape_cast %10 : vector<1x256xf32> to vector<1x256xf32>
    %27 = vector.broadcast %26 : vector<1x256xf32> to vector<4x256xf32>
    %28 = vector.broadcast %cst_8 : f32 to vector<4x256xf32>
    %29 = arith.select %25, %27, %28 : vector<4x256xi1>, vector<4x256xf32>
    %30 = arith.mulf %16, %29 : vector<4x256xf32>
    %cst_9 = arith.constant dense<0.000000e+00> : vector<256xf32>
    %31 = vector.multi_reduction <add>, %30, %cst_9 [0] : vector<4x256xf32> to vector<256xf32>
    %32 = vector.shape_cast %31 : vector<256xf32> to vector<1x256xf32>
    %33 = math.log %19 : vector<1x256xf32>
    %34 = arith.subf %32, %33 : vector<1x256xf32>
    %35 = arith.mulf %22, %29 : vector<4x256xf32>
    %cst_10 = arith.constant dense<0.000000e+00> : vector<256xf32>
    %36 = vector.multi_reduction <add>, %35, %cst_10 [0] : vector<4x256xf32> to vector<256xf32>
    %37 = vector.shape_cast %36 : vector<256xf32> to vector<1x256xf32>
    %cst_11 = arith.constant 1.000000e+00 : f32
    %38 = vector.broadcast %cst_11 : f32 to vector<1x256xf32>
    %39 = arith.subf %38, %37 : vector<1x256xf32>
    %cst_12 = arith.constant 0.000000e+00 : f32
    %40 = vector.broadcast %cst_12 : f32 to vector<1x256xf32>
    %41 = arith.maximumf %39, %40 : vector<1x256xf32>
    %cst_13 = arith.constant 0.000000e+00 : f32
    %42 = vector.broadcast %cst_13 : f32 to vector<1x256xf32>
    %43 = arith.subf %42, %34 : vector<1x256xf32>
    %44 = arith.mulf %41, %43 : vector<1x256xf32>
    %45 = arith.mulf %44, %10 : vector<1x256xf32>
    %46 = vector.broadcast %10 : vector<1x256xf32> to vector<4x256xf32>
    %47 = arith.mulf %22, %46 : vector<4x256xf32>
    %c0_14 = arith.constant 0 : index
    %c0_15 = arith.constant 0 : index
    %c0_16 = arith.constant 0 : index
    %48 = vector.load %arg4[%c0_14, %c0_15, %c0_16] : memref<1x4x128xf32, #tpu.memory_space<vmem>>, vector<1x4x128xf32>
    %49 = vector.shape_cast %48 : vector<1x4x128xf32> to vector<4x128xf32>
    %50 = vector.extract_strided_slice %35 {offsets = [0, 0], sizes = [4, 128], strides = [1, 1]} : vector<4x256xf32> to vector<4x128xf32>
    %51 = vector.extract_strided_slice %35 {offsets = [0, 128], sizes = [4, 128], strides = [1, 1]} : vector<4x256xf32> to vector<4x128xf32>
    %52 = arith.addf %50, %51 : vector<4x128xf32>
    %53 = arith.addf %49, %52 : vector<4x128xf32>
    %c0_17 = arith.constant 0 : index
    %c0_18 = arith.constant 0 : index
    %c0_19 = arith.constant 0 : index
    %54 = vector.load %arg4[%c0_17, %c0_18, %c0_19] : memref<1x4x128xf32, #tpu.memory_space<vmem>>, vector<1x4x128xf32>
    %55 = vector.shape_cast %54 : vector<1x4x128xf32> to vector<4x128xf32>
    %56 = vector.shape_cast %53 : vector<4x128xf32> to vector<1x4x128xf32>
    tpu.vector_store %arg4[%c0_17, %c0_18, %c0_19], %56 {strides = array<i32>} : memref<1x4x128xf32, #tpu.memory_space<vmem>>, vector<1x4x128xf32>,
    %c0_20 = arith.constant 0 : index
    %c0_21 = arith.constant 0 : index
    %c0_22 = arith.constant 0 : index
    %57 = vector.load %arg5[%c0_20, %c0_21, %c0_22] : memref<1x4x128xf32, #tpu.memory_space<vmem>>, vector<1x4x128xf32>
    %58 = vector.shape_cast %57 : vector<1x4x128xf32> to vector<4x128xf32>
    %59 = vector.extract_strided_slice %47 {offsets = [0, 0], sizes = [4, 128], strides = [1, 1]} : vector<4x256xf32> to vector<4x128xf32>
    %60 = vector.extract_strided_slice %47 {offsets = [0, 128], sizes = [4, 128], strides = [1, 1]} : vector<4x256xf32> to vector<4x128xf32>
    %61 = arith.addf %59, %60 : vector<4x128xf32>
    %62 = arith.addf %58, %61 : vector<4x128xf32>
    %c0_23 = arith.constant 0 : index
    %c0_24 = arith.constant 0 : index
    %c0_25 = arith.constant 0 : index
    %63 = vector.load %arg5[%c0_23, %c0_24, %c0_25] : memref<1x4x128xf32, #tpu.memory_space<vmem>>, vector<1x4x128xf32>
    %64 = vector.shape_cast %63 : vector<1x4x128xf32> to vector<4x128xf32>
    %65 = vector.shape_cast %62 : vector<4x128xf32> to vector<1x4x128xf32>
    tpu.vector_store %arg5[%c0_23, %c0_24, %c0_25], %65 {strides = array<i32>} : memref<1x4x128xf32, #tpu.memory_space<vmem>>, vector<1x4x128xf32>,
    %c0_26 = arith.constant 0 : index
    %c0_27 = arith.constant 0 : index
    %c0_28 = arith.constant 0 : index
    %66 = vector.load %arg6[%c0_26, %c0_27, %c0_28] : memref<1x4x128xf32, #tpu.memory_space<vmem>>, vector<1x4x128xf32>
    %67 = vector.shape_cast %66 : vector<1x4x128xf32> to vector<4x128xf32>
    %68 = vector.extract_strided_slice %29 {offsets = [0, 0], sizes = [4, 128], strides = [1, 1]} : vector<4x256xf32> to vector<4x128xf32>
    %69 = vector.extract_strided_slice %29 {offsets = [0, 128], sizes = [4, 128], strides = [1, 1]} : vector<4x256xf32> to vector<4x128xf32>
    %70 = arith.addf %68, %69 : vector<4x128xf32>
    %71 = arith.addf %67, %70 : vector<4x128xf32>
    %c0_29 = arith.constant 0 : index
    %c0_30 = arith.constant 0 : index
    %c0_31 = arith.constant 0 : index
    %72 = vector.load %arg6[%c0_29, %c0_30, %c0_31] : memref<1x4x128xf32, #tpu.memory_space<vmem>>, vector<1x4x128xf32>
    %73 = vector.shape_cast %72 : vector<1x4x128xf32> to vector<4x128xf32>
    %74 = vector.shape_cast %71 : vector<4x128xf32> to vector<1x4x128xf32>
    tpu.vector_store %arg6[%c0_29, %c0_30, %c0_31], %74 {strides = array<i32>} : memref<1x4x128xf32, #tpu.memory_space<vmem>>, vector<1x4x128xf32>,
    %c0_32 = arith.constant 0 : index
    %c0_33 = arith.constant 0 : index
    %c0_34 = arith.constant 0 : index
    %75 = vector.load %arg7[%c0_32, %c0_33, %c0_34] : memref<1x1x128xf32, #tpu.memory_space<vmem>>, vector<1x1x128xf32>
    %76 = vector.shape_cast %75 : vector<1x1x128xf32> to vector<1x128xf32>
    %77 = vector.extract_strided_slice %45 {offsets = [0, 0], sizes = [1, 128], strides = [1, 1]} : vector<1x256xf32> to vector<1x128xf32>
    %78 = vector.extract_strided_slice %45 {offsets = [0, 128], sizes = [1, 128], strides = [1, 1]} : vector<1x256xf32> to vector<1x128xf32>
    %79 = arith.addf %77, %78 : vector<1x128xf32>
    %80 = arith.addf %76, %79 : vector<1x128xf32>
    %c0_35 = arith.constant 0 : index
    %c0_36 = arith.constant 0 : index
    %c0_37 = arith.constant 0 : index
    %81 = vector.load %arg7[%c0_35, %c0_36, %c0_37] : memref<1x1x128xf32, #tpu.memory_space<vmem>>, vector<1x1x128xf32>
    %82 = vector.shape_cast %81 : vector<1x1x128xf32> to vector<1x128xf32>
    %83 = vector.shape_cast %80 : vector<1x128xf32> to vector<1x1x128xf32>
    tpu.vector_store %arg7[%c0_35, %c0_36, %c0_37], %83 {strides = array<i32>} : memref<1x1x128xf32, #tpu.memory_space<vmem>>, vector<1x1x128xf32>,
    %c0_38 = arith.constant 0 : index
    %c0_39 = arith.constant 0 : index
    %c0_40 = arith.constant 0 : index
    %84 = vector.load %arg8[%c0_38, %c0_39, %c0_40] : memref<1x1x128xf32, #tpu.memory_space<vmem>>, vector<1x1x128xf32>
    %85 = vector.shape_cast %84 : vector<1x1x128xf32> to vector<1x128xf32>
    %86 = vector.extract_strided_slice %10 {offsets = [0, 0], sizes = [1, 128], strides = [1, 1]} : vector<1x256xf32> to vector<1x128xf32>
    %87 = vector.extract_strided_slice %10 {offsets = [0, 128], sizes = [1, 128], strides = [1, 1]} : vector<1x256xf32> to vector<1x128xf32>
    %88 = arith.addf %86, %87 : vector<1x128xf32>
    %89 = arith.addf %85, %88 : vector<1x128xf32>
    %c0_41 = arith.constant 0 : index
    %c0_42 = arith.constant 0 : index
    %c0_43 = arith.constant 0 : index
    %90 = vector.load %arg8[%c0_41, %c0_42, %c0_43] : memref<1x1x128xf32, #tpu.memory_space<vmem>>, vector<1x1x128xf32>
    %91 = vector.shape_cast %90 : vector<1x1x128xf32> to vector<1x128xf32>
    %92 = vector.shape_cast %89 : vector<1x128xf32> to vector<1x1x128xf32>
    tpu.vector_store %arg8[%c0_41, %c0_42, %c0_43], %92 {strides = array<i32>} : memref<1x1x128xf32, #tpu.memory_space<vmem>>, vector<1x1x128xf32>,
    return
  }
  func.func @transform_0(%arg0: i32, %arg1: i32) -> (i32, i32, i32) {
    %c2_i32 = arith.constant 2 : i32
    %0 = arith.muli %arg0, %c2_i32 : i32
    %1 = arith.addi %0, %arg1 : i32
    %c1_i32 = arith.constant 1 : i32
    %2 = arith.minsi %1, %c1_i32 : i32
    %c0_i32 = arith.constant 0 : i32
    %c0_i32_0 = arith.constant 0 : i32
    %c0_i32_1 = arith.constant 0 : i32
    return %2, %c0_i32, %c0_i32_0 : i32, i32, i32
  }
  func.func @transform_1(%arg0: i32, %arg1: i32) -> (i32, i32, i32) {
    %c2_i32 = arith.constant 2 : i32
    %0 = arith.muli %arg0, %c2_i32 : i32
    %1 = arith.addi %0, %arg1 : i32
    %c1_i32 = arith.constant 1 : i32
    %2 = arith.minsi %1, %c1_i32 : i32
    %c0_i32 = arith.constant 0 : i32
    %c0_i32_0 = arith.constant 0 : i32
    %c0_i32_1 = arith.constant 0 : i32
    return %2, %c0_i32, %c0_i32_0 : i32, i32, i32
  }
  func.func @transform_2(%arg0: i32, %arg1: i32) -> (i32, i32, i32) {
    %c0_i32 = arith.constant 0 : i32
    %c0_i32_0 = arith.constant 0 : i32
    %c0_i32_1 = arith.constant 0 : i32
    return %arg0, %c0_i32, %c0_i32_0 : i32, i32, i32
  }
  func.func @transform_3(%arg0: i32, %arg1: i32) -> (i32, i32, i32) {
    %c0_i32 = arith.constant 0 : i32
    %c0_i32_0 = arith.constant 0 : i32
    %c0_i32_1 = arith.constant 0 : i32
    return %arg0, %c0_i32, %c0_i32_0 : i32, i32, i32
  }
  func.func @transform_4(%arg0: i32, %arg1: i32) -> (i32, i32, i32) {
    %c0_i32 = arith.constant 0 : i32
    %c0_i32_0 = arith.constant 0 : i32
    %c0_i32_1 = arith.constant 0 : i32
    return %arg0, %c0_i32, %c0_i32_0 : i32, i32, i32
  }
  func.func @transform_5(%arg0: i32, %arg1: i32) -> (i32, i32, i32) {
    %c0_i32 = arith.constant 0 : i32
    %c0_i32_0 = arith.constant 0 : i32
    %c0_i32_1 = arith.constant 0 : i32
    return %arg0, %c0_i32, %c0_i32_0 : i32, i32, i32
  }
  func.func @transform_6(%arg0: i32, %arg1: i32) -> (i32, i32, i32) {
    %c0_i32 = arith.constant 0 : i32
    %c0_i32_0 = arith.constant 0 : i32
    %c0_i32_1 = arith.constant 0 : i32
    return %arg0, %c0_i32, %c0_i32_0 : i32, i32, i32
  }
}

</mosaic_0001>

<llo_original>
// kernel: tpu_custom_call.1
$region0: #{tpu_custom_call.1}
  #allocation0 [shape = 'u32[]', space=smem, size = 0x4, offset = 0x4, fixed_abs, tag = 'smem constant byte address 0x4 - core index']
  #allocation1 [shape = 'u32[144,128]{1,0:T(1,128)}', space=vmem, size = 0x12000, scoped, tag = 'internal scratch']
  %s0 = inlined_call_operand.hbm [shape: f32[2,4,256], index: 0, kind: input, shape index: {}]
  %s1 = inlined_call_operand.hbm [shape: s32[2,1,256], index: 1, kind: input, shape index: {}]
  %s2 = inlined_call_operand.hbm [shape: f32[1,4,128], index: 2, kind: output, shape index: {0}]
  %s3 = inlined_call_operand.hbm [shape: f32[1,4,128], index: 3, kind: output, shape index: {1}]
  %s4 = inlined_call_operand.hbm [shape: f32[1,4,128], index: 4, kind: output, shape index: {2}]
  %s5 = inlined_call_operand.hbm [shape: f32[1,1,128], index: 5, kind: output, shape index: {3}]
  %s6 = inlined_call_operand.hbm [shape: f32[1,1,128], index: 6, kind: output, shape index: {4}]
  %7 = xla_tuple %s2, %s3, %s4, %s5, %s6
  %s8 = sld [smem:[#allocation0]]
  $region85: #{tpu_custom_call.1} parent=0
    _
  %s10 = ssub.s32 1, %s8
  %s11 = scalar_select 0, %s10, %s8
  $region1: #{tpu_custom_call.1} parent=0
    #allocation2 [shape = 'u8[8192]{0}', space=vmem, size = 0x2000, scoped, tag = 'input window, operand 0']
    #allocation3 [shape = 's32[2]{0}', space=sflag, size = 0x8, scoped, tag = 'scoped memory for tpu_custom_call.1']
    #allocation4 [shape = 's32[2]{0}', space=sflag, size = 0x8, scoped, tag = 'scoped memory for tpu_custom_call.1']
    #allocation5 [shape = 'u8[2048]{0}', space=vmem, size = 0x800, scoped, tag = 'input window, operand 1']
    #allocation6 [shape = 's32[2]{0}', space=sflag, size = 0x8, scoped, tag = 'scoped memory for tpu_custom_call.1']
    #allocation7 [shape = 'u8[2048]{0}', space=vmem, size = 0x800, scoped, tag = 'output window, operand 0, single buffered']
    #allocation8 [shape = 'u8[2048]{0}', space=vmem, size = 0x800, scoped, tag = 'output window, operand 1, single buffered']
    #allocation9 [shape = 's32[1]{0}', space=sflag, size = 0x4, scoped, tag = 'scoped memory for tpu_custom_call.1']
    #allocation10 [shape = 'u8[2048]{0}', space=vmem, size = 0x800, scoped, tag = 'output window, operand 2, single buffered']
    #allocation11 [shape = 'u8[512]{0}', space=vmem, size = 0x400, scoped, tag = 'output window, operand 3, single buffered']
    #allocation12 [shape = 's32[1]{0}', space=sflag, size = 0x4, scoped, tag = 'scoped memory for tpu_custom_call.1']
    #allocation13 [shape = 'u8[512]{0}', space=vmem, size = 0x400, scoped, tag = 'output window, operand 4, single buffered']
    %12 = vsyncpa [#allocation3], 0
    %s13 = scalar_lea.sflag [#allocation3], 1
    %14 = vsyncpa %s13, 0
    %15 = vsyncpa [#allocation6], 0
    %s16 = scalar_lea.sflag [#allocation6], 1
    %17 = vsyncpa %s16, 0
    %18 = vsyncpa [#allocation4], 0
    %19 = vsyncpa [#allocation9], 0
    %20 = vsyncpa [#allocation12], 0
    loop: start=0, step=1, limit=4
    $region2: #{tpu_custom_call.1} parent=1 // loop_pre_header
      _
    $region3: #{tpu_custom_call.1} parent=1 // loop_header
      %s22 = sphi 0, %s26
      %p23 = scmp.ge.s32.totalorder %s22, 4
      %s29 = sphi 0, %s41
      %s30 = sphi 0, %s37
      %s31 = sphi 0, %s29
      %s32 = sphi 0, %s30
      %s33 = sphi 0, %s31
      %s34 = sphi 0, %s32
      %s52 = sphi 0, %s54
      %s55 = sphi 0, %s52
      %s56 = sphi 0, %s55
      %s72 = sphi 0, %s56
      %s86 = sphi 0, %s88
      %s89 = sphi 0, %s86
      %s90 = sphi 0, %s89
      %s106 = sphi 0, %s90
      %s112 = sphi 0, %s114
      %s115 = sphi 0, %s112
      %s116 = sphi 0, %s115
      %s132 = sphi 0, %s116
      %s138 = sphi 0, %s140
      %s141 = sphi 0, %s138
      %s142 = sphi 0, %s141
      %s158 = sphi 0, %s142
      %s164 = sphi 0, %s166
      %s167 = sphi 0, %s164
      %s168 = sphi 0, %s167
      %s184 = sphi 0, %s168
      %s190 = sphi 0, %s192
      %s193 = sphi 0, %s190
      %s194 = sphi 0, %s193
      %s210 = sphi 0, %s194
      %s216 = sphi 0, %s218
      %s219 = sphi 0, %s216
      %s220 = sphi 0, %s219
      %s236 = sphi 0, %s220
    $region4: #{tpu_custom_call.1} parent=1 // loop_header_branch
      %25 = sbr.rel (%p23) target = $region8
    $region5: #{tpu_custom_call.1} parent=1 // loop_body
      %s27 = ssub.s32 %s22, 1
      %s28 = ssub.s32 %s22, 2
      %s35 = sadd.s32 1, %s30
      %p36 = scmp.ge.s32.totalorder %s35, 2
      %s37 = scalar_select %p36, 0, %s35
      %s38 = sadd.s32 1, %s29
      %s39 = scalar_select %p36, %s38, %s29
      %p40 = scmp.ge.s32.totalorder %s39, 1
      %s41 = scalar_select %p40, 0, %s39
      %s42 = smul.u32 %s29, 2
      %s43 = sadd.s32 %s42, %s30
      %p44 = scmp.lt.s32.totalorder %s43, 1
      %s45 = scalar_select %p44, %s43, 1
      %s46 = smul.u32 %s41, 2
      %s47 = sadd.s32 %s46, %s37
      %p48 = scmp.lt.s32.totalorder %s47, 1
      %s49 = scalar_select %p48, %s47, 1
      %s50 = ssub.s32 %s45, %s49
      %p51 = scmp.eq.s32.totalorder %s50, 0
      %s53 = sadd.s32 %s52, 1
      %s54 = scalar_select %p51, %s52, %s53
      %p57 = pneg %p51
      %p58 = scmp.eq.s32.totalorder %s22, 1
      %p59 = por %p57, %p58
      %p60 = scmp.ne.s32.totalorder %s52, %s55
      %p61 = scmp.eq.s32.totalorder %s22, 0
      %p62 = por %p60, %p61
      %p63 = scmp.ne.s32.totalorder %s52, %s55
      %p64 = scmp.eq.s32.totalorder %s27, 1
      %p65 = por %p63, %p64
      %p66 = scmp.ne.s32.totalorder %s55, %s56
      %p67 = scmp.eq.s32.totalorder %s27, 0
      %p68 = por %p66, %p67
      %p69 = scmp.ne.s32.totalorder %s55, %s56
      %p70 = scmp.eq.s32.totalorder %s28, 1
      %p71 = por %p69, %p70
      %p73 = scmp.ne.s32.totalorder %s56, %s72
      %p74 = scmp.eq.s32.totalorder %s28, 0
      %p75 = por %p73, %p74
      %s76 = smul.u32 %s29, 2
      %s77 = sadd.s32 %s76, %s30
      %p78 = scmp.lt.s32.totalorder %s77, 1
      %s79 = scalar_select %p78, %s77, 1
      %s80 = smul.u32 %s41, 2
      %s81 = sadd.s32 %s80, %s37
      %p82 = scmp.lt.s32.totalorder %s81, 1
      %s83 = scalar_select %p82, %s81, 1
      %s84 = ssub.s32 %s79, %s83
      %p85 = scmp.eq.s32.totalorder %s84, 0
      %s87 = sadd.s32 %s86, 1
      %s88 = scalar_select %p85, %s86, %s87
      %p91 = pneg %p85
      %p92 = scmp.eq.s32.totalorder %s22, 1
      %p93 = por %p91, %p92
      %p94 = scmp.ne.s32.totalorder %s86, %s89
      %p95 = scmp.eq.s32.totalorder %s22, 0
      %p96 = por %p94, %p95
      %p97 = scmp.ne.s32.totalorder %s86, %s89
      %p98 = scmp.eq.s32.totalorder %s27, 1
      %p99 = por %p97, %p98
      %p100 = scmp.ne.s32.totalorder %s89, %s90
      %p101 = scmp.eq.s32.totalorder %s27, 0
      %p102 = por %p100, %p101
      %p103 = scmp.ne.s32.totalorder %s89, %s90
      %p104 = scmp.eq.s32.totalorder %s28, 1
      %p105 = por %p103, %p104
      %p107 = scmp.ne.s32.totalorder %s90, %s106
      %p108 = scmp.eq.s32.totalorder %s28, 0
      %p109 = por %p107, %p108
      %s110 = ssub.s32 %s29, %s41
      %p111 = scmp.eq.s32.totalorder %s110, 0
      %s113 = sadd.s32 %s112, 1
      %s114 = scalar_select %p111, %s112, %s113
      %p117 = pneg %p111
      %p118 = scmp.eq.s32.totalorder %s22, 1
      %p119 = por %p117, %p118
      %p120 = scmp.ne.s32.totalorder %s112, %s115
      %p121 = scmp.eq.s32.totalorder %s22, 0
      %p122 = por %p120, %p121
      %p123 = scmp.ne.s32.totalorder %s112, %s115
      %p124 = scmp.eq.s32.totalorder %s27, 1
      %p125 = por %p123, %p124
      %p126 = scmp.ne.s32.totalorder %s115, %s116
      %p127 = scmp.eq.s32.totalorder %s27, 0
      %p128 = por %p126, %p127
      %p129 = scmp.ne.s32.totalorder %s115, %s116
      %p130 = scmp.eq.s32.totalorder %s28, 1
      %p131 = por %p129, %p130
      %p133 = scmp.ne.s32.totalorder %s116, %s132
      %p134 = scmp.eq.s32.totalorder %s28, 0
      %p135 = por %p133, %p134
      %s136 = ssub.s32 %s29, %s41
      %p137 = scmp.eq.s32.totalorder %s136, 0
      %s139 = sadd.s32 %s138, 1
      %s140 = scalar_select %p137, %s138, %s139
      %p143 = pneg %p137
      %p144 = scmp.eq.s32.totalorder %s22, 1
      %p145 = por %p143, %p144
      %p146 = scmp.ne.s32.totalorder %s138, %s141
      %p147 = scmp.eq.s32.totalorder %s22, 0
      %p148 = por %p146, %p147
      %p149 = scmp.ne.s32.totalorder %s138, %s141
      %p150 = scmp.eq.s32.totalorder %s27, 1
      %p151 = por %p149, %p150
      %p152 = scmp.ne.s32.totalorder %s141, %s142
      %p153 = scmp.eq.s32.totalorder %s27, 0
      %p154 = por %p152, %p153
      %p155 = scmp.ne.s32.totalorder %s141, %s142
      %p156 = scmp.eq.s32.totalorder %s28, 1
      %p157 = por %p155, %p156
      %p159 = scmp.ne.s32.totalorder %s142, %s158
      %p160 = scmp.eq.s32.totalorder %s28, 0
      %p161 = por %p159, %p160
      %s162 = ssub.s32 %s29, %s41
      %p163 = scmp.eq.s32.totalorder %s162, 0
      %s165 = sadd.s32 %s164, 1
      %s166 = scalar_select %p163, %s164, %s165
      %p169 = pneg %p163
      %p170 = scmp.eq.s32.totalorder %s22, 1
      %p171 = por %p169, %p170
      %p172 = scmp.ne.s32.totalorder %s164, %s167
      %p173 = scmp.eq.s32.totalorder %s22, 0
      %p174 = por %p172, %p173
      %p175 = scmp.ne.s32.totalorder %s164, %s167
      %p176 = scmp.eq.s32.totalorder %s27, 1
      %p177 = por %p175, %p176
      %p178 = scmp.ne.s32.totalorder %s167, %s168
      %p179 = scmp.eq.s32.totalorder %s27, 0
      %p180 = por %p178, %p179
      %p181 = scmp.ne.s32.totalorder %s167, %s168
      %p182 = scmp.eq.s32.totalorder %s28, 1
      %p183 = por %p181, %p182
      %p185 = scmp.ne.s32.totalorder %s168, %s184
      %p186 = scmp.eq.s32.totalorder %s28, 0
      %p187 = por %p185, %p186
      %s188 = ssub.s32 %s29, %s41
      %p189 = scmp.eq.s32.totalorder %s188, 0
      %s191 = sadd.s32 %s190, 1
      %s192 = scalar_select %p189, %s190, %s191
      %p195 = pneg %p189
      %p196 = scmp.eq.s32.totalorder %s22, 1
      %p197 = por %p195, %p196
      %p198 = scmp.ne.s32.totalorder %s190, %s193
      %p199 = scmp.eq.s32.totalorder %s22, 0
      %p200 = por %p198, %p199
      %p201 = scmp.ne.s32.totalorder %s190, %s193
      %p202 = scmp.eq.s32.totalorder %s27, 1
      %p203 = por %p201, %p202
      %p204 = scmp.ne.s32.totalorder %s193, %s194
      %p205 = scmp.eq.s32.totalorder %s27, 0
      %p206 = por %p204, %p205
      %p207 = scmp.ne.s32.totalorder %s193, %s194
      %p208 = scmp.eq.s32.totalorder %s28, 1
      %p209 = por %p207, %p208
      %p211 = scmp.ne.s32.totalorder %s194, %s210
      %p212 = scmp.eq.s32.totalorder %s28, 0
      %p213 = por %p211, %p212
      %s214 = ssub.s32 %s29, %s41
      %p215 = scmp.eq.s32.totalorder %s214, 0
      %s217 = sadd.s32 %s216, 1
      %s218 = scalar_select %p215, %s216, %s217
      %p221 = pneg %p215
      %p222 = scmp.eq.s32.totalorder %s22, 1
      %p223 = por %p221, %p222
      %p224 = scmp.ne.s32.totalorder %s216, %s219
      %p225 = scmp.eq.s32.totalorder %s22, 0
      %p226 = por %p224, %p225
      %p227 = scmp.ne.s32.totalorder %s216, %s219
      %p228 = scmp.eq.s32.totalorder %s27, 1
      %p229 = por %p227, %p228
      %p230 = scmp.ne.s32.totalorder %s219, %s220
      %p231 = scmp.eq.s32.totalorder %s27, 0
      %p232 = por %p230, %p231
      %p233 = scmp.ne.s32.totalorder %s219, %s220
      %p234 = scmp.eq.s32.totalorder %s28, 1
      %p235 = por %p233, %p234
      %p237 = scmp.ne.s32.totalorder %s220, %s236
      %p238 = scmp.eq.s32.totalorder %s28, 0
      %p239 = por %p237, %p238
      %p240 = scmp.le.s32.totalorder 1, %s22
      %p241 = scmp.lt.s32.totalorder %s22, 3
      %p242 = pnand %p240, %p241
      %p243 = pneg %p242
      // Predicated region
      $region9: #{tpu_custom_call.1} parent=5 // pred_check
        _
      $region10: #{tpu_custom_call.1} parent=5 // pred_check_branch
        %245 = sbr.rel (%p242) target = $region12
      $region11: #{tpu_custom_call.1} parent=5 // pred_region
        %s246 = ssub.s32 %s22, 1
      $region12: #{tpu_custom_call.1} parent=5 // pred_fallthru
        _
      %p247 = scmp.lt.s32.totalorder %s22, 2
      // Predicated region
      $region13: #{tpu_custom_call.1} parent=5 // pred_check
        %p248 = pneg %p247
      $region14: #{tpu_custom_call.1} parent=5 // pred_check_branch
        %250 = sbr.rel (%p248) target = $region16
      $region15: #{tpu_custom_call.1} parent=5 // pred_region
        // Predicated region
        $region17: #{tpu_custom_call.1} parent=15 // pred_check
          %p251 = pneg %p62
        $region18: #{tpu_custom_call.1} parent=15 // pred_check_branch
          %253 = sbr.rel (%p251) target = $region20
        $region19: #{tpu_custom_call.1} parent=15 // pred_region
          %s254 = sand.u32 %s52, 1
          %s255 = scalar_lea.sflag [#allocation3], %s254
          %s256 = sand.u32 %s52, 1
          %s257 = smul.addr %s256, 8
          %s258 = scalar_lea.vmem [#allocation2], %s257
          %s259 = smul.u32 %s29, 2
          %s260 = sadd.s32 %s259, %s30
          %p261 = scmp.lt.s32.totalorder %s260, 1
          %s262 = scalar_select %p261, %s260, 1
          %s264 = ssub.s32 128, 128
          %265 = vsyncadd %s255, %s264
          %s266 = smul.addr %s262, 2
          %s267 = smul.addr %s266, 64
          %s268 = scalar_lea.hbm %s0, %s267
          %s270 = sshll.u32 %s258, 4
          %s271 = int_to_ptr.vmem [resolvable:$true] %s270
          %273 = dma.hbm_to_vmem [thread:$0]  %s268, 128, %s271, %s255
        $region20: #{tpu_custom_call.1} parent=15 // pred_fallthru
          _
        // Predicated region
        $region21: #{tpu_custom_call.1} parent=15 // pred_check
          %p274 = pneg %p96
        $region22: #{tpu_custom_call.1} parent=15 // pred_check_branch
          %276 = sbr.rel (%p274) target = $region24
        $region23: #{tpu_custom_call.1} parent=15 // pred_region
          %s277 = sand.u32 %s86, 1
          %s278 = scalar_lea.sflag [#allocation6], %s277
          %s279 = sand.u32 %s86, 1
          %s280 = smul.addr %s279, 2
          %s281 = scalar_lea.vmem [#allocation5], %s280
          %s282 = smul.u32 %s29, 2
          %s283 = sadd.s32 %s282, %s30
          %p284 = scmp.lt.s32.totalorder %s283, 1
          %s285 = scalar_select %p284, %s283, 1
          %s287 = ssub.s32 32, 32
          %288 = vsyncadd %s278, %s287
          %s289 = smul.addr %s285, 2
          %s290 = smul.addr %s289, 16
          %s291 = scalar_lea.hbm %s1, %s290
          %s293 = sshll.u32 %s281, 4
          %s294 = int_to_ptr.vmem [resolvable:$true] %s293
          %296 = dma.hbm_to_vmem [thread:$0]  %s291, 32, %s294, %s278
        $region24: #{tpu_custom_call.1} parent=15 // pred_fallthru
          _
      $region16: #{tpu_custom_call.1} parent=5 // pred_fallthru
        _
      %p297 = scmp.le.s32.totalorder 1, %s22
      %p298 = scmp.lt.s32.totalorder %s22, 3
      %p299 = pnand %p297, %p298
      %p300 = pneg %p299
      // Predicated region
      $region25: #{tpu_custom_call.1} parent=5 // pred_check
        _
      $region26: #{tpu_custom_call.1} parent=5 // pred_check_branch
        %302 = sbr.rel (%p299) target = $region28
      $region27: #{tpu_custom_call.1} parent=5 // pred_region
        %s303 = ssub.s32 %s22, 1
        %s304 = sand.u32 %s55, 1
        %s305 = scalar_lea.sflag [#allocation3], %s304
        %s306 = sand.u32 %s55, 1
        %s307 = smul.addr %s306, 8
        %s308 = scalar_lea.vmem [#allocation2], %s307
        // Predicated region
        $region29: #{tpu_custom_call.1} parent=27 // pred_check
          %p309 = pneg %p68
        $region30: #{tpu_custom_call.1} parent=27 // pred_check_branch
          %311 = sbr.rel (%p309) target = $region32
        $region31: #{tpu_custom_call.1} parent=27 // pred_region
          %312 = dma.done %s305, 128
        $region32: #{tpu_custom_call.1} parent=27 // pred_fallthru
          _
        %s313 = sand.u32 %s89, 1
        %s314 = scalar_lea.sflag [#allocation6], %s313
        %s315 = sand.u32 %s89, 1
        %s316 = smul.addr %s315, 2
        %s317 = scalar_lea.vmem [#allocation5], %s316
        // Predicated region
        $region33: #{tpu_custom_call.1} parent=27 // pred_check
          %p318 = pneg %p102
        $region34: #{tpu_custom_call.1} parent=27 // pred_check_branch
          %320 = sbr.rel (%p318) target = $region36
        $region35: #{tpu_custom_call.1} parent=27 // pred_region
          %321 = dma.done %s314, 32
        $region36: #{tpu_custom_call.1} parent=27 // pred_fallthru
          _
        %s322 = sand.u32 %s55, 1
        %s323 = scalar_lea.sflag [#allocation3], %s322
        %s324 = sand.u32 %s55, 1
        %s325 = smul.addr %s324, 8
        %s326 = scalar_lea.vmem [#allocation2], %s325
        %p327 = pneg %p68
        %p328 = pneg %p65
        %s329 = sand.u32 %s89, 1
        %s330 = scalar_lea.sflag [#allocation6], %s329
        %s331 = sand.u32 %s89, 1
        %s332 = smul.addr %s331, 2
        %s333 = scalar_lea.vmem [#allocation5], %s332
        %p334 = pneg %p102
        %p335 = pneg %p99
        %p336 = pneg %p128
        %p337 = pneg %p125
        %p338 = pneg %p154
        %p339 = pneg %p151
        %p340 = pneg %p180
        %p341 = pneg %p177
        %p342 = pneg %p206
        %p343 = pneg %p203
        %p344 = pneg %p232
        %p345 = pneg %p229
        %s346 = smul.u32 %s31, 2
        %s347 = sadd.s32 %s346, %s32
        %p348 = scmp.lt.s32.totalorder %s347, 1
        %s349 = scalar_select %p348, %s347, 1
        %s350 = smul.u32 %s31, 2
        %s351 = sadd.s32 %s350, %s32
        %p352 = scmp.lt.s32.totalorder %s351, 1
        %s353 = scalar_select %p352, %s351, 1
        %p354 = scmp.eq.s32.totalorder %s32, 0
        // Predicated region
        $region37: #{tpu_custom_call.1} parent=27 // pred_check
          %p355 = pneg %p354
        $region38: #{tpu_custom_call.1} parent=27 // pred_check_branch
          %357 = sbr.rel (%p355) target = $region40
        $region39: #{tpu_custom_call.1} parent=27 // pred_region
          %358 = vst [vmem:[#allocation7] sm:$0xf] 0.0
          %359 = vst [vmem:[#allocation8] sm:$0xf] 0.0
          %360 = vst [vmem:[#allocation10] sm:$0xf] 0.0
          %361 = vst [vmem:[#allocation11] sm:$0x1] 0.0
          %362 = vst [vmem:[#allocation13] sm:$0x1] 0.0
        $region40: #{tpu_custom_call.1} parent=27 // pred_fallthru
          _
        %v363 = vld [vmem:[%s308] sm:$0xff]
        %v364 = vld [vmem:[%s317] sm:$0x3]
        %vm365 = vcmp.ne.s32.totalorder %v364, 255
        %v366 = vsel %vm365, 1, 0
        %v367 = vcvt.s32.f32 %v366
        %v368 = vsel %vm365, %v364, 0
        %v370 = vcombine.high %v363, %v363
        %vm372 = vcmask 1043456
        %v373 = vsel %vm372, %v363, -inf
        %v374 = vrot.slane %v373, 4
        %v375 = vmax.f32 %v373, %v374
        %v376 = vrot.slane %v375, 2
        %v377 = vmax.f32 %v375, %v376
        %v378 = vrot.slane %v377, 1
        %v379 = vmax.f32 %v377, %v378
        %v380 = vsel %vm372, %v370, -inf
        %v381 = vrot.slane %v380, 4
        %v382 = vmax.f32 %v380, %v381
        %v383 = vrot.slane %v382, 2
        %v384 = vmax.f32 %v382, %v383
        %v385 = vrot.slane %v384, 1
        %v386 = vmax.f32 %v384, %v385
        %v389 = vcombine.low %v379, %v386
        %v391 = vsub.f32 %v363, %v389
        %v392 = vmul.f32 %v391, 1.442695
        %v393 = vpow.pop %v392
        %v395 = vcombine.high %v393, %v393
        %v397 = vsel %vm372, %v393, 0.0
        %v398 = vrot.slane %v397, 4
        %v399 = vadd.f32 %v397, %v398
        %v400 = vrot.slane %v399, 2
        %v401 = vadd.f32 %v399, %v400
        %v402 = vrot.slane %v401, 1
        %v403 = vadd.f32 %v401, %v402
        %v404 = vsel %vm372, %v395, 0.0
        %v405 = vrot.slane %v404, 4
        %v406 = vadd.f32 %v404, %v405
        %v407 = vrot.slane %v406, 2
        %v408 = vadd.f32 %v406, %v407
        %v409 = vrot.slane %v408, 1
        %v410 = vadd.f32 %v408, %v409
        %v411 = vrcp.pop %v403
        %v412 = vrcp.pop %v410
        %v415 = vcombine.low %v411, %v412
        %v417 = vmul.f32 %v393, %v415
        %v418 = vlaneseq
        %v419 = vshrl.u32 %v418, 7
        %v420 = vlaneseq
        %v421 = vshrl.u32 %v420, 7
        %v422 = vsub.s32 0, %v421
        %v423 = vrot.slane %v368, %v422
        %v424 = vlaneseq
        %v425 = vshrl.u32 %v424, 7
        %v426 = vsub.s32 1, %v425
        %v427 = vrot.slane %v368, %v426
        %vm428 = vcmp.eq.s32.totalorder %v419, %v423
        %vm429 = vcmp.eq.s32.totalorder %v419, %v427
        %v431 = vlaneseq
        %v432 = vshrl.u32 %v431, 7
        %v433 = vsub.s32 0, %v432
        %v434 = vrot.slane %v367, %v433
        %v435 = vlaneseq
        %v436 = vshrl.u32 %v435, 7
        %v437 = vsub.s32 1, %v436
        %v438 = vrot.slane %v367, %v437
        %v441 = vsel %vm428, %v434, 0.0
        %v442 = vsel %vm429, %v438, 0.0
        %v445 = vcombine.low %v441, %v442
        %v447 = vmul.f32 %v391, %v445
        %v449 = vcombine.high %v447, %v447
        %v451 = vsel %vm372, %v447, 0.0
        %v452 = vrot.slane %v451, 4
        %v453 = vadd.f32 %v451, %v452
        %v454 = vrot.slane %v453, 2
        %v455 = vadd.f32 %v453, %v454
        %v456 = vrot.slane %v455, 1
        %v457 = vadd.f32 %v455, %v456
        %v458 = vsel %vm372, %v449, 0.0
        %v459 = vrot.slane %v458, 4
        %v460 = vadd.f32 %v458, %v459
        %v461 = vrot.slane %v460, 2
        %v462 = vadd.f32 %v460, %v461
        %v463 = vrot.slane %v462, 1
        %v464 = vadd.f32 %v462, %v463
        %v465 = vlog2.pop %v403
        %v466 = vmul.f32 %v465, 0.6931472
        %v467 = vlog2.pop %v410
        %v468 = vmul.f32 %v467, 0.6931472
        %v469 = vsub.f32 %v457, %v466
        %v470 = vsub.f32 %v464, %v468
        %v471 = vmul.f32 %v417, %v445
        %v473 = vcombine.high %v471, %v471
        %v475 = vsel %vm372, %v471, 0.0
        %v476 = vrot.slane %v475, 4
        %v477 = vadd.f32 %v475, %v476
        %v478 = vrot.slane %v477, 2
        %v479 = vadd.f32 %v477, %v478
        %v480 = vrot.slane %v479, 1
        %v481 = vadd.f32 %v479, %v480
        %v482 = vsel %vm372, %v473, 0.0
        %v483 = vrot.slane %v482, 4
        %v484 = vadd.f32 %v482, %v483
        %v485 = vrot.slane %v484, 2
        %v486 = vadd.f32 %v484, %v485
        %v487 = vrot.slane %v486, 1
        %v488 = vadd.f32 %v486, %v487
        %v489 = vsub.f32 1.0, %v481
        %v490 = vsub.f32 1.0, %v488
        %v491 = vmax.f32 %v489, 0.0
        %v492 = vmax.f32 %v490, 0.0
        %v493 = vsub.f32 0.0, %v469
        %v494 = vsub.f32 0.0, %v470
        %v495 = vmul.f32 %v491, %v493
        %v496 = vmul.f32 %v492, %v494
        %v497 = vmul.f32 %v495, %v434
        %v498 = vmul.f32 %v496, %v438
        %v499 = vcombine.low %v434, %v438
        %v501 = vmul.f32 %v417, %v499
        %v502 = vld [vmem:[#allocation7] sm:$0xf]
        %v503 = vrot.slane %v471, 4
        %v505 = vadd.f32 %v471, %v503
        %v506 = vadd.f32 %v502, %v505
        %507 = vst [vmem:[#allocation7] sm:$0xf] %v506
        %v508 = vld [vmem:[#allocation8] sm:$0xf]
        %v510 = vrot.slane %v501, 4
        %v512 = vadd.f32 %v501, %v510
        %v513 = vadd.f32 %v508, %v512
        %514 = vst [vmem:[#allocation8] sm:$0xf] %v513
        %v515 = vld [vmem:[#allocation10] sm:$0xf]
        %v516 = vadd.f32 %v441, %v442
        %v517 = vadd.f32 %v515, %v516
        %518 = vst [vmem:[#allocation10] sm:$0xf] %v517
        %v519 = vld [vmem:[#allocation11] sm:$0x1]
        %v520 = vadd.f32 %v497, %v498
        %v521 = vadd.f32 %v519, %v520
        %522 = vst [vmem:[#allocation11] sm:$0x1] %v521
        %v523 = vld [vmem:[#allocation13] sm:$0x1]
        %v524 = vrot.slane %v367, 1
        %v526 = vadd.f32 %v367, %v524
        %v527 = vadd.f32 %v523, %v526
        %528 = vst [vmem:[#allocation13] sm:$0x1] %v527
        // Predicated region
        $region41: #{tpu_custom_call.1} parent=27 // pred_check
          %p529 = pneg %p125
        $region42: #{tpu_custom_call.1} parent=27 // pred_check_branch
          %531 = sbr.rel (%p529) target = $region44
        $region43: #{tpu_custom_call.1} parent=27 // pred_region
          %s533 = ssub.s32 64, 64
          %534 = vsyncadd [#allocation4], %s533
          %s535 = smul.addr %s31, 64
          %s536 = scalar_lea.hbm %s2, %s535
          %s538 = sshll.u32 [#allocation7], 4
          %s539 = int_to_ptr.vmem [resolvable:$true] %s538
          %541 = dma.vmem_to_hbm [thread:$0]  %s539, 64, %s536, [#allocation4]
        $region44: #{tpu_custom_call.1} parent=27 // pred_fallthru
          _
        // Predicated region
        $region45: #{tpu_custom_call.1} parent=27 // pred_check
          %p542 = pneg %p151
        $region46: #{tpu_custom_call.1} parent=27 // pred_check_branch
          %544 = sbr.rel (%p542) target = $region48
        $region47: #{tpu_custom_call.1} parent=27 // pred_region
          %s546 = ssub.s32 64, 64
          %547 = vsyncadd [#allocation9], %s546
          %s548 = smul.addr %s31, 64
          %s549 = scalar_lea.hbm %s3, %s548
          %s551 = sshll.u32 [#allocation8], 4
          %s552 = int_to_ptr.vmem [resolvable:$true] %s551
          %554 = dma.vmem_to_hbm [thread:$0]  %s552, 64, %s549, [#allocation9]
        $region48: #{tpu_custom_call.1} parent=27 // pred_fallthru
          _
        // Predicated region
        $region49: #{tpu_custom_call.1} parent=27 // pred_check
          %p555 = pneg %p177
        $region50: #{tpu_custom_call.1} parent=27 // pred_check_branch
          %557 = sbr.rel (%p555) target = $region52
        $region51: #{tpu_custom_call.1} parent=27 // pred_region
          %s559 = ssub.s32 64, 64
          %560 = vsyncadd [#allocation9], %s559
          %s561 = smul.addr %s31, 64
          %s562 = scalar_lea.hbm %s4, %s561
          %s564 = sshll.u32 [#allocation10], 4
          %s565 = int_to_ptr.vmem [resolvable:$true] %s564
          %567 = dma.vmem_to_hbm [thread:$0]  %s565, 64, %s562, [#allocation9]
        $region52: #{tpu_custom_call.1} parent=27 // pred_fallthru
          _
        // Predicated region
        $region53: #{tpu_custom_call.1} parent=27 // pred_check
          %p568 = pneg %p203
        $region54: #{tpu_custom_call.1} parent=27 // pred_check_branch
          %570 = sbr.rel (%p568) target = $region56
        $region55: #{tpu_custom_call.1} parent=27 // pred_region
          %s572 = ssub.s32 16, 16
          %573 = vsyncadd [#allocation12], %s572
          %s574 = smul.addr %s31, 16
          %s575 = scalar_lea.hbm %s5, %s574
          %s577 = sshll.u32 [#allocation11], 4
          %s578 = int_to_ptr.vmem [resolvable:$true] %s577
          %580 = dma.vmem_to_hbm [thread:$0]  %s578, 16, %s575, [#allocation12]
        $region56: #{tpu_custom_call.1} parent=27 // pred_fallthru
          _
        // Predicated region
        $region57: #{tpu_custom_call.1} parent=27 // pred_check
          %p581 = pneg %p229
        $region58: #{tpu_custom_call.1} parent=27 // pred_check_branch
          %583 = sbr.rel (%p581) target = $region60
        $region59: #{tpu_custom_call.1} parent=27 // pred_region
          %s585 = ssub.s32 16, 16
          %586 = vsyncadd [#allocation12], %s585
          %s587 = smul.addr %s31, 16
          %s588 = scalar_lea.hbm %s6, %s587
          %s590 = sshll.u32 [#allocation13], 4
          %s591 = int_to_ptr.vmem [resolvable:$true] %s590
          %593 = dma.vmem_to_hbm [thread:$0]  %s591, 16, %s588, [#allocation12]
        $region60: #{tpu_custom_call.1} parent=27 // pred_fallthru
          _
        // Predicated region
        $region61: #{tpu_custom_call.1} parent=27 // pred_check
          %p594 = pneg %p125
        $region62: #{tpu_custom_call.1} parent=27 // pred_check_branch
          %596 = sbr.rel (%p594) target = $region64
        $region63: #{tpu_custom_call.1} parent=27 // pred_region
          %597 = dma.done [#allocation4], 64
        $region64: #{tpu_custom_call.1} parent=27 // pred_fallthru
          _
        // Predicated region
        $region65: #{tpu_custom_call.1} parent=27 // pred_check
          %p598 = pneg %p151
        $region66: #{tpu_custom_call.1} parent=27 // pred_check_branch
          %600 = sbr.rel (%p598) target = $region68
        $region67: #{tpu_custom_call.1} parent=27 // pred_region
          %601 = dma.done [#allocation9], 64
        $region68: #{tpu_custom_call.1} parent=27 // pred_fallthru
          _
        // Predicated region
        $region69: #{tpu_custom_call.1} parent=27 // pred_check
          %p602 = pneg %p177
        $region70: #{tpu_custom_call.1} parent=27 // pred_check_branch
          %604 = sbr.rel (%p602) target = $region72
        $region71: #{tpu_custom_call.1} parent=27 // pred_region
          %605 = dma.done [#allocation9], 64
        $region72: #{tpu_custom_call.1} parent=27 // pred_fallthru
          _
        // Predicated region
        $region73: #{tpu_custom_call.1} parent=27 // pred_check
          %p606 = pneg %p203
        $region74: #{tpu_custom_call.1} parent=27 // pred_check_branch
          %608 = sbr.rel (%p606) target = $region76
        $region75: #{tpu_custom_call.1} parent=27 // pred_region
          %609 = dma.done [#allocation12], 16
        $region76: #{tpu_custom_call.1} parent=27 // pred_fallthru
          _
        // Predicated region
        $region77: #{tpu_custom_call.1} parent=27 // pred_check
          %p610 = pneg %p229
        $region78: #{tpu_custom_call.1} parent=27 // pred_check_branch
          %612 = sbr.rel (%p610) target = $region80
        $region79: #{tpu_custom_call.1} parent=27 // pred_region
          %613 = dma.done [#allocation12], 16
        $region80: #{tpu_custom_call.1} parent=27 // pred_fallthru
          _
      $region28: #{tpu_custom_call.1} parent=5 // pred_fallthru
        _
      %p614 = scmp.le.s32.totalorder 2, %s22
      // Predicated region
      $region81: #{tpu_custom_call.1} parent=5 // pred_check
        %p615 = pneg %p614
      $region82: #{tpu_custom_call.1} parent=5 // pred_check_branch
        %617 = sbr.rel (%p615) target = $region84
      $region83: #{tpu_custom_call.1} parent=5 // pred_region
        %s618 = ssub.s32 %s22, 2
      $region84: #{tpu_custom_call.1} parent=5 // pred_fallthru
        _
    $region6: #{tpu_custom_call.1} parent=1 // loop_footer
      %s26 = sadd.s32 1, %s22
    $region7: #{tpu_custom_call.1} parent=1 // loop_footer_branch
      %21 = sbr.rel target = $region3
    $region8: #{tpu_custom_call.1} parent=1 // loop_exit
      _
    %619 = vsyncpa [#allocation3], 1
    %s620 = scalar_lea.sflag [#allocation3], 1
    %621 = vsyncpa %s620, 1
    %622 = vsyncpa [#allocation6], 1
    %s623 = scalar_lea.sflag [#allocation6], 1
    %624 = vsyncpa %s623, 1
    %625 = vsyncpa [#allocation4], 1
    %s626 = scalar_lea.sflag [#allocation4], 1
    %627 = vsyncpa %s626, 1
    %628 = vsyncpa [#allocation9], 1
    %629 = vsyncpa [#allocation12], 1

</llo_original>
